<compile_context>
chip_gen: v7x
topology: tpu7x:2x2x1
jax: 0.10.0
libtpu: 0.0.40
codegen_flags: <defaults>
</compile_context>

<pallas_src>
import functools

import numpy as np
import jax
import jax.numpy as jnp
from jax import lax
from jax.experimental import pallas as pl
from jax.experimental.pallas import tpu as pltpu

# ----------------------------- module configuration -----------------------------
HEAD_SIZE = [[2], [1], [2]]                        # M.head_size  (jmap, lmap, joff)
NUM_CLASS = sum(sum(HEAD_SIZE, []))                # 5
HEAD_OFF = np.cumsum([sum(h) for h in HEAD_SIZE])  # [2, 3, 5]  (channels 0:2, 2:3, 3:5)
NUM_STACKS = 2                                     # backbone stub stacks
FEATURE_CH = 8                                     # backbone stub feature channels
BN_EPS = 1e-5
CJ2_DTYPE = jnp.bfloat16                           # MXU operands for the 128->128 conv
                                                   # (f32 accumulation via preferred_element_type)

VMEM = pl.BlockSpec(memory_space=pltpu.MemorySpace.VMEM)
SMEM = pl.BlockSpec(memory_space=pltpu.MemorySpace.SMEM)


# =============================== helpers ==========================================
def fold_bn(bias, gamma, beta, mean, var):
    """Fold Conv bias + BatchNorm(running stats) into per-channel scale/shift."""
    scale = gamma / jnp.sqrt(var + BN_EPS)
    shift = beta + scale * (bias - mean)
    return scale.reshape(1, -1), shift.reshape(1, -1)


def _bilinear_matrix(out_size, in_size):
    """U (out,in) s.t. U @ x == F.interpolate(x, bilinear, align_corners=True) along rows."""
    u = np.zeros((out_size, in_size), np.float32)
    if out_size == 1 or in_size == 1:
        u[:, 0] = 1.0
        return u
    scale = (in_size - 1) / (out_size - 1)
    for i in range(out_size):
        s = i * scale
        lo = min(int(np.floor(s)), in_size - 1)
        hi = min(lo + 1, in_size - 1)
        frac = s - lo
        u[i, lo] += 1.0 - frac
        u[i, hi] += frac
    return u


# ===================== Kernel 1: backbone stub (1x1 conv projection) ==============
def _backbone_kernel(x_ref, w_ref, b_ref, o_ref):
    # x: (P, 3) pixels-major, w: (3, S*5 + FEATURE_CH), b: (1, cout)
    o_ref[...] = (jnp.dot(x_ref[...], w_ref[...],
                          preferred_element_type=jnp.float32) + b_ref[...])


def backbone_stub(params, image_nchw):
    # TODO(synk): real hourglass backbone `hg(...)` not provided; stubbed with a stride-2
    # subsample + one fused 1x1-conv projection (all stacks + feature in a single matmul).
    n = image_nchw.shape[0]
    x = jnp.transpose(image_nchw[:, :, ::2, ::2], (0, 2, 3, 1))      # (N, H, W, 3)
    hh, ww = x.shape[1], x.shape[2]
    x_pm = x.reshape(n * hh * ww, 3)                                 # pixels-major
    w_all = jnp.concatenate(list(params['bb_out_w']) + [params['bb_feat_w']], axis=1)
    b_all = jnp.concatenate(list(params['bb_out_b']) + [params['bb_feat_b']], axis=0)
    cout = NUM_STACKS * NUM_CLASS + FEATURE_CH
    out_all = pl.pallas_call(
        _backbone_kernel,
        out_shape=jax.ShapeDtypeStruct((n * hh * ww, cout), jnp.float32),
        in_specs=[VMEM, VMEM, VMEM],
        out_specs=VMEM,
    )(x_pm, w_all, b_all.reshape(1, -1))
    outs_hwc = jnp.stack(
        [out_all[:, NUM_CLASS * s:NUM_CLASS * (s + 1)].reshape(n, hh, ww, NUM_CLASS)
         for s in range(NUM_STACKS)], axis=0)                        # (S, N, H, W, 5)
    feature = jnp.transpose(
        out_all[:, NUM_STACKS * NUM_CLASS:].reshape(n, hh, ww, FEATURE_CH),
        (0, 3, 1, 2))                                                # NCHW, as in reference
    return outs_hwc, feature


# ================ Kernel 2: fused per-(stack, image) multitask head ===============
# Per grid point (s, b) this computes the whole head:
#   jmap_origin = conv_jmap(out[:, 0:2])           (3x3 C2->128 +BN+ReLU,
#                                                   3x3 C128->128 +BN+ReLU, 1x1 ->2)
#   jmap_ds     = latlayer(maxpool(out[:, 0:2]))   (2x2/2 pool, 3x3 C2->2)
#   jmap        = softmax_ch(jmap_origin + bilinear_up(jmap_ds))[..., 1]
#   lmap        = sigmoid(out[:, 2]) ; joff = sigmoid(out[:, 3:5]) - 0.5
def _head_kernel(out5_ref,
                 w1_ref, s1_ref, t1_ref,
                 w2_ref, s2_ref, t2_ref,
                 w3_ref, b3_ref,
                 wlat_ref, blat_ref,
                 kron_ref,
                 jmap_ref, lmap_ref, joff_ref,
                 xpad_ref, p1_ref, h1pad_ref, p2_ref, ppad_ref, plat_ref,
                 *, h, w):
    hw = h * w
    hp, wp = h // 2, w // 2
    taps = [(dy, dx) for dy in range(3) for dx in range(3)]

    x = out5_ref[...]                                  # (h, w, 5), channels-last
    xj = x[:, :, 0:2]                                  # jmap logits input (n_jtyp == 1)

    # ---- conv_jmap[0]: 3x3 conv 2->128 + folded BN + ReLU, single K=18 contraction --
    xpad_ref[...] = jnp.zeros_like(xpad_ref)
    xpad_ref[1:1 + h, 1:1 + w, :] = xj
    for t, (dy, dx) in enumerate(taps):                # im2col, K order = (dy, dx, cin)
        p1_ref[:, :, 2 * t:2 * t + 2] = xpad_ref[dy:dy + h, dx:dx + w, :]
    h1 = jnp.dot(p1_ref[...].reshape(hw, 18), w1_ref[...],
                 preferred_element_type=jnp.float32)
    h1 = jnp.maximum(h1 * s1_ref[...] + t1_ref[...], 0.0)           # (hw, 128)

    # ---- conv_jmap[1]: 3x3 conv 128->128 + folded BN + ReLU, single K=1152 (bf16) ---
    h1pad_ref[...] = jnp.zeros_like(h1pad_ref)
    h1pad_ref[1:1 + h, 1:1 + w, :] = h1.reshape(h, w, 128).astype(h1pad_ref.dtype)
    for t, (dy, dx) in enumerate(taps):                # lane-aligned 128-wide stores
        p2_ref[:, :, 128 * t:128 * (t + 1)] = h1pad_ref[dy:dy + h, dx:dx + w, :]
    h2 = jnp.dot(p2_ref[...].reshape(hw, 9 * 128), w2_ref[...],
                 preferred_element_type=jnp.float32)
    h2 = jnp.maximum(h2 * s2_ref[...] + t2_ref[...], 0.0)           # (hw, 128)

    # ---- conv_jmap[2]: 1x1 conv 128->2 ----------------------------------------------
    jorig = jnp.dot(h2, w3_ref[...], preferred_element_type=jnp.float32) + b3_ref[...]

    # ---- maxpool 2x2 stride 2 (pure VPU) + latlayer 3x3 conv 2->2 (K=18) ------------
    rmax = jnp.max(xj.reshape(hp, 2, w, 2), axis=1)                  # row-pair max (hp,w,2)
    ppad_ref[...] = jnp.zeros_like(ppad_ref)
    for j in range(wp):                                              # column-pair max
        ppad_ref[1:1 + hp, 1 + j:2 + j, :] = jnp.maximum(
            rmax[:, 2 * j:2 * j + 1, :], rmax[:, 2 * j + 1:2 * j + 2, :])
    for t, (dy, dx) in enumerate(taps):
        plat_ref[:, :, 2 * t:2 * t + 2] = ppad_ref[dy:dy + hp, dx:dx + wp, :]
    jds = jnp.dot(plat_ref[...].reshape(hp * wp, 18), wlat_ref[...],
                  preferred_element_type=jnp.float32) + blat_ref[...]   # (hp*wp, 2)

    # ---- bilinear upsample (align_corners=True) as one Kron matmul, add, softmax ----
    up = jnp.dot(kron_ref[...], jds, preferred_element_type=jnp.float32)  # (hw, 2)
    logits = (jorig + up).reshape(h, w, 2)
    mx = jnp.max(logits, axis=2, keepdims=True)
    e = jnp.exp(logits - mx)
    denom = jnp.sum(e, axis=2, keepdims=True)
    jmap_ref[...] = e[:, :, 1:2] / denom                             # softmax class 1

    # ---- lmap sigmoid, joff sigmoid - 0.5 (f32 elementwise) -------------------------
    lmap_ref[...] = jax.nn.sigmoid(x[:, :, 2:3])
    joff_ref[...] = jax.nn.sigmoid(x[:, :, 3:5]) - 0.5


def run_head(params, outs_hwc):
    """outs_hwc: (S, N, H, W, 5). Returns jmap (S,N,H,W), lmap (S,N,H,W), joff (S,N,2,H,W)."""
    S, N, H, W, C = outs_hwc.shape
    assert C == NUM_CLASS and H % 2 == 0 and W % 2 == 0
    hp, wp = H // 2, W // 2

    s1, t1 = fold_bn(params['cj1_b'], params['cj1_bn_gamma'], params['cj1_bn_beta'],
                     params['cj1_bn_mean'], params['cj1_bn_var'])
    s2, t2 = fold_bn(params['cj2_b'], params['cj2_bn_gamma'], params['cj2_bn_beta'],
                     params['cj2_bn_mean'], params['cj2_bn_var'])
    # Kron(U_row, U_col): (H*W, hp*wp) operator == bilinear upsample, align_corners=True.
    kron = jnp.asarray(np.kron(_bilinear_matrix(H, hp), _bilinear_matrix(W, wp)))

    def cspec(shape):
        nd = len(shape)
        return pl.BlockSpec(shape, lambda *_: (0,) * nd)

    jmap5, lmap5, joff5 = pl.pallas_call(
        functools.partial(_head_kernel, h=H, w=W),
        grid=(S, N),
        in_specs=[
            pl.BlockSpec((None, None, H, W, C), lambda s, b: (s, b, 0, 0, 0)),
            cspec((18, 128)), cspec((1, 128)), cspec((1, 128)),
            cspec((9 * 128, 128)), cspec((1, 128)), cspec((1, 128)),
            cspec((128, 2)), cspec((1, 2)),
            cspec((18, 2)), cspec((1, 2)),
            cspec((H * W, hp * wp)),
        ],
        out_specs=(
            pl.BlockSpec((None, None, H, W, 1), lambda s, b: (s, b, 0, 0, 0)),
            pl.BlockSpec((None, None, H, W, 1), lambda s, b: (s, b, 0, 0, 0)),
            pl.BlockSpec((None, None, H, W, 2), lambda s, b: (s, b, 0, 0, 0)),
        ),
        out_shape=(
            jax.ShapeDtypeStruct((S, N, H, W, 1), jnp.float32),
            jax.ShapeDtypeStruct((S, N, H, W, 1), jnp.float32),
            jax.ShapeDtypeStruct((S, N, H, W, 2), jnp.float32),
        ),
        scratch_shapes=[
            pltpu.VMEM((H + 2, W + 2, 2), jnp.float32),      # padded jmap input
            pltpu.VMEM((H, W, 18), jnp.float32),             # cj1 im2col (K=18)
            pltpu.VMEM((H + 2, W + 2, 128), CJ2_DTYPE),      # padded h1
            pltpu.VMEM((H, W, 9 * 128), CJ2_DTYPE),          # cj2 im2col (K=1152)
            pltpu.VMEM((hp + 2, wp + 2, 2), jnp.float32),    # padded pooled map
            pltpu.VMEM((hp, wp, 18), jnp.float32),           # latlayer im2col (K=18)
        ],
        compiler_params=pltpu.CompilerParams(
            dimension_semantics=("parallel", "parallel")),
    )(outs_hwc,
      params['cj1_w'], s1, t1,
      params['cj2_w'].astype(CJ2_DTYPE), s2, t2,
      params['cj3_w'], params['cj3_b'].reshape(1, 2),
      params['lat_w'], params['lat_b'].reshape(1, 2),
      kron)

    jmap = jmap5[..., 0]                       # (S, N, H, W)
    lmap = lmap5[..., 0]                       # (S, N, H, W)
    joff = jnp.moveaxis(joff5, -1, 2)          # (S, N, 2, H, W)
    return jmap, lmap, joff


# ===== Kernel 3: gaussian-augmented junction target (batched separable Gaussian) ====
def _gaussjmap_kernel(alpha_ref, beta_ref, jmap_ref, o_ref):
    b, h, w = jmap_ref.shape
    a = alpha_ref[0]
    bt = beta_ref[0]
    inv_b2 = 1.0 / (bt * bt)
    ri = lax.broadcasted_iota(jnp.float32, (h, h), 0)
    rj = lax.broadcasted_iota(jnp.float32, (h, h), 1)
    g_row = jnp.exp(a * (ri - rj) ** 2 * inv_b2)                 # (h, h)
    ci = lax.broadcasted_iota(jnp.float32, (w, w), 0)
    cj = lax.broadcasted_iota(jnp.float32, (w, w), 1)
    g_col = jnp.exp(a * (ci - cj) ** 2 * inv_b2)                 # (w, w), symmetric
    m = jmap_ref[...]                                            # (b, h, w)
    # NOTE: exact float equality mirrors the reference `torch.argwhere(jmap == 1)`.
    mask = jnp.where(m == 1.0, 1.0, 0.0)
    g_row_b = jnp.broadcast_to(g_row, (b, h, h))
    g_col_b = jnp.broadcast_to(g_col, (b, w, w))
    tmp = jnp.einsum('bhi,biw->bhw', g_row_b, mask,
                     preferred_element_type=jnp.float32)
    gauss = jnp.einsum('bhj,bjw->bhw', tmp, g_col_b,
                       preferred_element_type=jnp.float32)
    v = m + gauss
    v = jnp.where(v <= 0.05, 0.0, v)
    v = jnp.where(v > 1.0, 1.0, v)
    o_ref[...] = v


def gauss_jmap_target(jmap_bhw, alpha, beta):
    return pl.pallas_call(
        _gaussjmap_kernel,
        out_shape=jax.ShapeDtypeStruct(jmap_bhw.shape, jnp.float32),
        in_specs=[SMEM, SMEM, VMEM],
        out_specs=VMEM,
    )(alpha, beta, jmap_bhw.astype(jnp.float32))


# ------------------------------- parameters -------------------------------------
# Conv weights are stored pre-flattened as (kh*kw*Cin, Cout) with row order (dy, dx, cin):
#   w_flat[(dy*kw + dx) * Cin + ci, co] == w_torch[co, ci, dy, dx]
def init_params(key):
    ks = list(jax.random.split(key, 12))

    def wflat(k, kh, kw, cin, cout):
        fan_in = kh * kw * cin
        return jax.random.normal(k, (kh * kw * cin, cout), jnp.float32) / np.sqrt(fan_in)

    def bias(k, cout):
        return 0.05 * jax.random.normal(k, (cout,), jnp.float32)

    p = {}
    p['cj1_w'], p['cj1_b'] = wflat(ks[0], 3, 3, 2, 128), bias(ks[1], 128)
    p['cj2_w'], p['cj2_b'] = wflat(ks[2], 3, 3, 128, 128), bias(ks[3], 128)
    p['cj3_w'], p['cj3_b'] = wflat(ks[4], 1, 1, 128, 2), bias(ks[5], 2)
    p['lat_w'], p['lat_b'] = wflat(ks[6], 3, 3, 2, 2), bias(ks[7], 2)
    for name, c in (('cj1', 128), ('cj2', 128)):      # PyTorch BN defaults (inference)
        p[f'{name}_bn_gamma'] = jnp.ones((c,), jnp.float32)
        p[f'{name}_bn_beta'] = jnp.zeros((c,), jnp.float32)
        p[f'{name}_bn_mean'] = jnp.zeros((c,), jnp.float32)
        p[f'{name}_bn_var'] = jnp.ones((c,), jnp.float32)
    p['gaussalpha'] = jnp.array([-0.5], jnp.float32)
    p['gaussbeta'] = jnp.array([2.0], jnp.float32)
    # backbone stub (1x1 projections)
    p['bb_out_w'] = [wflat(jax.random.fold_in(ks[8], s), 1, 1, 3, NUM_CLASS)
                     for s in range(NUM_STACKS)]
    p['bb_out_b'] = [bias(jax.random.fold_in(ks[9], s), NUM_CLASS)
                     for s in range(NUM_STACKS)]
    p['bb_feat_w'], p['bb_feat_b'] = wflat(ks[10], 1, 1, 3, FEATURE_CH), bias(ks[11], FEATURE_CH)
    return p


# ------------------------------- forward pass ------------------------------------
def multitask_learner_forward(params, input_dict):
    image = input_dict['image']                                   # NCHW
    outs_hwc, feature = backbone_stub(params, image)              # (S,N,H,W,5), (N,C,H,W)
    result = {'feature': feature}

    # ---- target-side processing (local copy only; never reaches `result`) ----------
    T = dict(input_dict['target'])
    n_jtyp = T['jmap'].shape[1]
    assert n_jtyp == 1, "head_size [[2],[1],[2]] implies a single junction type"
    gauss = gauss_jmap_target(T['jmap'][:, 0, :, :],
                              params['gaussalpha'], params['gaussbeta'])
    T['gaussjmap'] = gauss[:, None, :, :]
    T['jmap'] = jnp.transpose(T['jmap'], (1, 0, 2, 3))
    T['gaussjmap'] = jnp.transpose(T['gaussjmap'], (1, 0, 2, 3))
    T['joff'] = jnp.transpose(T['joff'], (1, 2, 0, 3, 4))

    # ---- fused head over all stacks (only stack 0 reaches `result`, as in reference);
    #      in testing mode the reference stops after stack 0, so only stack 0 is run ---
    heads_in = outs_hwc[:1] if input_dict['mode'] == 'testing' else outs_hwc
    jmap, lmap, joff = run_head(params, heads_in)

    result['preds'] = {
        'jmap': jmap[0][:, None, :, :],             # (N, 1, H, W)   softmax class 1
        'lmap': lmap[0],                            # (N, H, W)
        'joff': joff[0][:, None, :, :, :],          # (N, 1, 2, H, W)
    }
    return result, T


# ----------------------------------- main -----------------------------------------
if __name__ == "__main__":
    key = jax.random.PRNGKey(0)
    pkey, ikey, jkey = jax.random.split(key, 3)
    params = init_params(pkey)

    batch, img_h, img_w = 2, 32, 32
    row = col = img_h // 2                    # backbone heatmap resolution (16x16)

    image = jax.random.normal(ikey, (batch, 3, img_h, img_w), jnp.float32)
    jmap_t = jnp.zeros((batch, 1, row, col), jnp.float32)
    jmap_t = (jmap_t.at[0, 0, 3, 5].set(1.0)
                    .at[0, 0, 10, 12].set(1.0)
                    .at[1, 0, 7, 7].set(1.0))
    joff_t = jax.random.uniform(jkey, (batch, 1, 2, row, col), jnp.float32) - 0.5

    input_dict = {'image': image,
                  'target': {'jmap': jmap_t, 'joff': joff_t},
                  'mode': 'training'}

    result, targets = multitask_learner_forward(params, input_dict)
    jax.block_until_ready(result)
    jax.block_until_ready(targets)

    assert result['feature'].shape == (batch, FEATURE_CH, row, col)
    assert result['preds']['jmap'].shape == (batch, 1, row, col)
    assert result['preds']['lmap'].shape == (batch, row, col)
    assert result['preds']['joff'].shape == (batch, 1, 2, row, col)
    assert targets['gaussjmap'].shape == (1, batch, row, col)
    jm = result['preds']['jmap']
    assert bool(jnp.all((jm >= 0.0) & (jm <= 1.0)))   # softmax output is a probability

    print("KERNEL_OK")
</pallas_src>

<mosaic_0001>
module attributes {stable_mosaic.version = 11 : i64} {
  func.func @_backbone_kernel(%arg0: memref<512x3xf32, #tpu.memory_space<vmem>>, %arg1: memref<3x18xf32, #tpu.memory_space<vmem>>, %arg2: memref<1x18xf32, #tpu.memory_space<vmem>>, %arg3: memref<512x18xf32, #tpu.memory_space<vmem>>) attributes {dimension_semantics = [], scalar_prefetch = 0 : i64, scratch_operands = 0 : i64, tpu.core_type = #tpu.core_type<tc>} {
    %c0 = arith.constant 0 : index
    %c0_0 = arith.constant 0 : index
    %0 = vector.load %arg0[%c0, %c0_0] : memref<512x3xf32, #tpu.memory_space<vmem>>, vector<512x3xf32>
    %c0_1 = arith.constant 0 : index
    %c0_2 = arith.constant 0 : index
    %1 = vector.load %arg1[%c0_1, %c0_2] : memref<3x18xf32, #tpu.memory_space<vmem>>, vector<3x18xf32>
    %cst = arith.constant dense<0.000000e+00> : vector<512x18xf32>
    %2 = tpu.matmul %0, %1, %cst {dimension_numbers = #tpu.dot_dimension_numbers<[1], [0], [0], [1], [0, 0, 1, 1], [], []>} : vector<512x3xf32>, vector<3x18xf32>, vector<512x18xf32> -> vector<512x18xf32>
    %c0_3 = arith.constant 0 : index
    %c0_4 = arith.constant 0 : index
    %3 = vector.load %arg2[%c0_3, %c0_4] : memref<1x18xf32, #tpu.memory_space<vmem>>, vector<1x18xf32>
    %4 = vector.broadcast %3 : vector<1x18xf32> to vector<512x18xf32>
    %5 = arith.addf %2, %4 : vector<512x18xf32>
    %c0_5 = arith.constant 0 : index
    %c0_6 = arith.constant 0 : index
    %6 = vector.load %arg3[%c0_5, %c0_6] : memref<512x18xf32, #tpu.memory_space<vmem>>, vector<512x18xf32>
    tpu.vector_store %arg3[%c0_5, %c0_6], %5 {strides = array<i32>} : memref<512x18xf32, #tpu.memory_space<vmem>>, vector<512x18xf32>,
    return
  }
}

</mosaic_0001>

<llo_original>
// kernel: tpu_custom_call.1
$region0: #{tpu_custom_call.1}
  #allocation0 [shape = 'u32[]', space=smem, size = 0x4, offset = 0x4, fixed_abs, tag = 'smem constant byte address 0x4 - core index']
  #allocation1 [shape = 'u32[144,128]{1,0:T(1,128)}', space=vmem, size = 0x12000, scoped, tag = 'internal scratch']
  %s0 = inlined_call_operand.vmem [shape: f32[512,3], index: 0, kind: input, shape index: {}]
  %s1 = inlined_call_operand.vmem [shape: f32[3,18], index: 1, kind: input, shape index: {}]
  %s2 = inlined_call_operand.vmem [shape: f32[1,18], index: 2, kind: input, shape index: {}]
  %s3 = inlined_call_operand.vmem [shape: f32[512,18], index: 3, kind: output, shape index: {}]
  %s4 = sld [smem:[#allocation0]]
  $region22: #{tpu_custom_call.1} parent=0
    _
  %s6 = ssub.s32 1, %s4
  %s7 = scalar_select 0, %s6, %s4
  // Predicated region
  $region2: #{tpu_custom_call.1} parent=0 // pred_check
    _
  $region3: #{tpu_custom_call.1} parent=0 // pred_check_branch
    %9 = sbr.rel (0) target = $region5
  $region4: #{tpu_custom_call.1} parent=0 // pred_region
    _
  $region5: #{tpu_custom_call.1} parent=0 // pred_fallthru
    _
  // Predicated region
  $region6: #{tpu_custom_call.1} parent=0 // pred_check
    _
  $region7: #{tpu_custom_call.1} parent=0 // pred_check_branch
    %11 = sbr.rel (0) target = $region9
  $region8: #{tpu_custom_call.1} parent=0 // pred_region
    _
  $region9: #{tpu_custom_call.1} parent=0 // pred_fallthru
    _
  // Predicated region
  $region10: #{tpu_custom_call.1} parent=0 // pred_check
    _
  $region11: #{tpu_custom_call.1} parent=0 // pred_check_branch
    %13 = sbr.rel (0) target = $region13
  $region12: #{tpu_custom_call.1} parent=0 // pred_region
    _
  $region13: #{tpu_custom_call.1} parent=0 // pred_fallthru
    _
  %v14 = vld [vmem:[%s0] sm:$0xff]
  %v15 = vld [vmem:[%s0 + $0x8] sm:$0xff]
  %v16 = vld [vmem:[%s0 + $0x10] sm:$0xff]
  %v17 = vld [vmem:[%s0 + $0x18] sm:$0xff]
  %v18 = vld [vmem:[%s0 + $0x20] sm:$0xff]
  %v19 = vld [vmem:[%s0 + $0x28] sm:$0xff]
  %v20 = vld [vmem:[%s0 + $0x30] sm:$0xff]
  %v21 = vld [vmem:[%s0 + $0x38] sm:$0xff]
  %v22 = vld [vmem:[%s0 + $0x40] sm:$0xff]
  %v23 = vld [vmem:[%s0 + $0x48] sm:$0xff]
  %v24 = vld [vmem:[%s0 + $0x50] sm:$0xff]
  %v25 = vld [vmem:[%s0 + $0x58] sm:$0xff]
  %v26 = vld [vmem:[%s0 + $0x60] sm:$0xff]
  %v27 = vld [vmem:[%s0 + $0x68] sm:$0xff]
  %v28 = vld [vmem:[%s0 + $0x70] sm:$0xff]
  %v29 = vld [vmem:[%s0 + $0x78] sm:$0xff]
  %v30 = vld [vmem:[%s0 + $0x80] sm:$0xff]
  %v31 = vld [vmem:[%s0 + $0x88] sm:$0xff]
  %v32 = vld [vmem:[%s0 + $0x90] sm:$0xff]
  %v33 = vld [vmem:[%s0 + $0x98] sm:$0xff]
  %v34 = vld [vmem:[%s0 + $0xa0] sm:$0xff]
  %v35 = vld [vmem:[%s0 + $0xa8] sm:$0xff]
  %v36 = vld [vmem:[%s0 + $0xb0] sm:$0xff]
  %v37 = vld [vmem:[%s0 + $0xb8] sm:$0xff]
  %v38 = vld [vmem:[%s0 + $0xc0] sm:$0xff]
  %v39 = vld [vmem:[%s0 + $0xc8] sm:$0xff]
  %v40 = vld [vmem:[%s0 + $0xd0] sm:$0xff]
  %v41 = vld [vmem:[%s0 + $0xd8] sm:$0xff]
  %v42 = vld [vmem:[%s0 + $0xe0] sm:$0xff]
  %v43 = vld [vmem:[%s0 + $0xe8] sm:$0xff]
  %v44 = vld [vmem:[%s0 + $0xf0] sm:$0xff]
  %v45 = vld [vmem:[%s0 + $0xf8] sm:$0xff]
  %v46 = vld [vmem:[%s0 + $0x100] sm:$0xff]
  %v47 = vld [vmem:[%s0 + $0x108] sm:$0xff]
  %v48 = vld [vmem:[%s0 + $0x110] sm:$0xff]
  %v49 = vld [vmem:[%s0 + $0x118] sm:$0xff]
  %v50 = vld [vmem:[%s0 + $0x120] sm:$0xff]
  %v51 = vld [vmem:[%s0 + $0x128] sm:$0xff]
  %v52 = vld [vmem:[%s0 + $0x130] sm:$0xff]
  %v53 = vld [vmem:[%s0 + $0x138] sm:$0xff]
  %v54 = vld [vmem:[%s0 + $0x140] sm:$0xff]
  %v55 = vld [vmem:[%s0 + $0x148] sm:$0xff]
  %v56 = vld [vmem:[%s0 + $0x150] sm:$0xff]
  %v57 = vld [vmem:[%s0 + $0x158] sm:$0xff]
  %v58 = vld [vmem:[%s0 + $0x160] sm:$0xff]
  %v59 = vld [vmem:[%s0 + $0x168] sm:$0xff]
  %v60 = vld [vmem:[%s0 + $0x170] sm:$0xff]
  %v61 = vld [vmem:[%s0 + $0x178] sm:$0xff]
  %v62 = vld [vmem:[%s0 + $0x180] sm:$0xff]
  %v63 = vld [vmem:[%s0 + $0x188] sm:$0xff]
  %v64 = vld [vmem:[%s0 + $0x190] sm:$0xff]
  %v65 = vld [vmem:[%s0 + $0x198] sm:$0xff]
  %v66 = vld [vmem:[%s0 + $0x1a0] sm:$0xff]
  %v67 = vld [vmem:[%s0 + $0x1a8] sm:$0xff]
  %v68 = vld [vmem:[%s0 + $0x1b0] sm:$0xff]
  %v69 = vld [vmem:[%s0 + $0x1b8] sm:$0xff]
  %v70 = vld [vmem:[%s0 + $0x1c0] sm:$0xff]
  %v71 = vld [vmem:[%s0 + $0x1c8] sm:$0xff]
  %v72 = vld [vmem:[%s0 + $0x1d0] sm:$0xff]
  %v73 = vld [vmem:[%s0 + $0x1d8] sm:$0xff]
  %v74 = vld [vmem:[%s0 + $0x1e0] sm:$0xff]
  %v75 = vld [vmem:[%s0 + $0x1e8] sm:$0xff]
  %v76 = vld [vmem:[%s0 + $0x1f0] sm:$0xff]
  %v77 = vld [vmem:[%s0 + $0x1f8] sm:$0xff]
  %v78 = vld [vmem:[%s1] sm:$0x7]
  %v79 = vld [vmem:[%s2] sm:$0x1]
  %v81 = vlaneseq
  %v82 = vshrl.u32 %v81, 7
  %v83 = vsub.s32 0, %v82
  %v84 = vrot.slane %v79, %v83
  %vm86 = vcmask 23552
  %v88 = vsel %vm86, %v14, 0
  %v91 = vsel %vm86, %v15, 0
  %v94 = vsel %vm86, %v16, 0
  %v97 = vsel %vm86, %v17, 0
  %v100 = vsel %vm86, %v18, 0
  %v103 = vsel %vm86, %v19, 0
  %v106 = vsel %vm86, %v20, 0
  %v109 = vsel %vm86, %v21, 0
  %v112 = vsel %vm86, %v22, 0
  %v115 = vsel %vm86, %v23, 0
  %v118 = vsel %vm86, %v24, 0
  %v121 = vsel %vm86, %v25, 0
  %v124 = vsel %vm86, %v26, 0
  %v127 = vsel %vm86, %v27, 0
  %v130 = vsel %vm86, %v28, 0
  %v133 = vsel %vm86, %v29, 0
  %v136 = vsel %vm86, %v30, 0
  %v139 = vsel %vm86, %v31, 0
  %v142 = vsel %vm86, %v32, 0
  %v145 = vsel %vm86, %v33, 0
  %v148 = vsel %vm86, %v34, 0
  %v151 = vsel %vm86, %v35, 0
  %v154 = vsel %vm86, %v36, 0
  %v157 = vsel %vm86, %v37, 0
  %v160 = vsel %vm86, %v38, 0
  %v163 = vsel %vm86, %v39, 0
  %v166 = vsel %vm86, %v40, 0
  %v169 = vsel %vm86, %v41, 0
  %v172 = vsel %vm86, %v42, 0
  %v175 = vsel %vm86, %v43, 0
  %v178 = vsel %vm86, %v44, 0
  %v181 = vsel %vm86, %v45, 0
  %v184 = vsel %vm86, %v46, 0
  %v187 = vsel %vm86, %v47, 0
  %v190 = vsel %vm86, %v48, 0
  %v193 = vsel %vm86, %v49, 0
  %v196 = vsel %vm86, %v50, 0
  %v199 = vsel %vm86, %v51, 0
  %v202 = vsel %vm86, %v52, 0
  %v205 = vsel %vm86, %v53, 0
  %v208 = vsel %vm86, %v54, 0
  %v211 = vsel %vm86, %v55, 0
  %v214 = vsel %vm86, %v56, 0
  %v217 = vsel %vm86, %v57, 0
  %v220 = vsel %vm86, %v58, 0
  %v223 = vsel %vm86, %v59, 0
  %v226 = vsel %vm86, %v60, 0
  %v229 = vsel %vm86, %v61, 0
  %v232 = vsel %vm86, %v62, 0
  %v235 = vsel %vm86, %v63, 0
  %v238 = vsel %vm86, %v64, 0
  %v241 = vsel %vm86, %v65, 0
  %v244 = vsel %vm86, %v66, 0
  %v247 = vsel %vm86, %v67, 0
  %v250 = vsel %vm86, %v68, 0
  %v253 = vsel %vm86, %v69, 0
  %v256 = vsel %vm86, %v70, 0
  %v259 = vsel %vm86, %v71, 0
  %v262 = vsel %vm86, %v72, 0
  %v265 = vsel %vm86, %v73, 0
  %v268 = vsel %vm86, %v74, 0
  %v271 = vsel %vm86, %v75, 0
  %v274 = vsel %vm86, %v76, 0
  %v277 = vsel %vm86, %v77, 0
  %vm279 = vcmask 1042432
  %v281 = vsel %vm279, %v78, 0
  %283 = vmatprep.subr.mxu0 0.0
  %284 = vmatpush1.msra.mxu0 %v281
  %285 = vmatprep.subr.mxu0 0.0
  %286 = vmatpush1.msra.mxu0 0.0
  %287 = vmatprep.subr.mxu0 0.0
  %288 = vmatpush1.msra.mxu0 0.0
  %289 = vmatprep.subr.mxu0 0.0
  %290 = vmatpush1.msra.mxu0 0.0
  %291 = vmatprep.subr.mxu0 0.0
  %292 = vmatpush1.msra.mxu0 0.0
  %293 = vmatprep.subr.mxu0 0.0
  %294 = vmatpush1.msra.mxu0 0.0
  %295 = vmatprep.subr.mxu0 0.0
  %296 = vmatpush1.msra.mxu0 0.0
  %297 = vmatprep.subr.mxu0 0.0
  %298 = vmatpush1.msra.mxu0 0.0
  %299 = vmatprep.subr.mxu0 0.0
  %300 = vmatpush1.msra.mxu0 0.0
  %301 = vmatprep.subr.mxu0 0.0
  %302 = vmatpush1.msra.mxu0 0.0
  %303 = vmatprep.subr.mxu0 0.0
  %304 = vmatpush1.msra.mxu0 0.0
  %305 = vmatprep.subr.mxu0 0.0
  %306 = vmatpush1.msra.mxu0 0.0
  %307 = vmatprep.subr.mxu0 0.0
  %308 = vmatpush1.msra.mxu0 0.0
  %309 = vmatprep.subr.mxu0 0.0
  %310 = vmatpush1.msra.mxu0 0.0
  %311 = vmatprep.subr.mxu0 0.0
  %312 = vmatpush1.msra.mxu0 0.0
  %313 = vmatprep.subr.mxu0 0.0
  %314 = vmatpush1.msra.mxu0 0.0
  %315 = vmatprep.subr.mxu0 0.0
  %316 = vmatpush1.msra.mxu0 0.0
  %317 = vmatprep.subr.mxu0 0.0
  %318 = vmatpush1.msra.mxu0 0.0
  %319 = vmatprep.subr.mxu0 0.0
  %320 = vmatpush1.msra.mxu0 0.0
  %321 = vmatprep.subr.mxu0 0.0
  %322 = vmatpush1.msra.mxu0 0.0
  %323 = vmatprep.subr.mxu0 0.0
  %324 = vmatpush1.msra.mxu0 0.0
  %325 = vmatprep.subr.mxu0 0.0
  %326 = vmatpush1.msra.mxu0 0.0
  %327 = vmatprep.subr.mxu0 0.0
  %328 = vmatpush1.msra.mxu0 0.0
  %329 = vmatprep.subr.mxu0 0.0
  %330 = vmatpush1.msra.mxu0 0.0
  %331 = vmatprep.subr.mxu0 0.0
  %332 = vmatpush1.msra.mxu0 0.0
  %333 = vmatprep.subr.mxu0 0.0
  %334 = vmatpush1.msra.mxu0 0.0
  %335 = vmatprep.subr.mxu0 0.0
  %336 = vmatpush1.msra.mxu0 0.0
  %337 = vmatprep.subr.mxu0 0.0
  %338 = vmatpush1.msra.mxu0 0.0
  %339 = vmatprep.subr.mxu0 0.0
  %340 = vmatpush1.msra.mxu0 0.0
  %341 = vmatprep.subr.mxu0 0.0
  %342 = vmatpush1.msra.mxu0 0.0
  %343 = vmatprep.subr.mxu0 0.0
  %344 = vmatpush1.msra.mxu0 0.0
  %345 = vmatprep.subr.mxu0 0.0
  %346 = vmatpush1.msra.mxu0 0.0
  %347 = vmatprep.mubr.f32.mxu0 0.0
  %348 = vmatmul.mubr.f32.gmra.mrb[0].mxu0 %v88
  %v349 = vpop.f32.mrb[0].mxu0
  %v350 = vadd.f32 %v84, %v349
  %v351 = vpop.f32.mrb[0].mxu0
  %352 = vmatprep.mubr.f32.mxu0 0.0
  %353 = vmatmul.mubr.f32.gmra.mrb[0].mxu0 %v91
  %v354 = vpop.f32.mrb[0].mxu0
  %v355 = vadd.f32 %v84, %v354
  %v356 = vpop.f32.mrb[0].mxu0
  %357 = vmatprep.mubr.f32.mxu0 0.0
  %358 = vmatmul.mubr.f32.gmra.mrb[0].mxu0 %v94
  %v359 = vpop.f32.mrb[0].mxu0
  %v360 = vadd.f32 %v84, %v359
  %v361 = vpop.f32.mrb[0].mxu0
  %362 = vmatprep.mubr.f32.mxu0 0.0
  %363 = vmatmul.mubr.f32.gmra.mrb[0].mxu0 %v97
  %v364 = vpop.f32.mrb[0].mxu0
  %v365 = vadd.f32 %v84, %v364
  %v366 = vpop.f32.mrb[0].mxu0
  %367 = vmatprep.mubr.f32.mxu0 0.0
  %368 = vmatmul.mubr.f32.gmra.mrb[0].mxu0 %v100
  %v369 = vpop.f32.mrb[0].mxu0
  %v370 = vadd.f32 %v84, %v369
  %v371 = vpop.f32.mrb[0].mxu0
  %372 = vmatprep.mubr.f32.mxu0 0.0
  %373 = vmatmul.mubr.f32.gmra.mrb[0].mxu0 %v103
  %v374 = vpop.f32.mrb[0].mxu0
  %v375 = vadd.f32 %v84, %v374
  %v376 = vpop.f32.mrb[0].mxu0
  %377 = vmatprep.mubr.f32.mxu0 0.0
  %378 = vmatmul.mubr.f32.gmra.mrb[0].mxu0 %v106
  %v379 = vpop.f32.mrb[0].mxu0
  %v380 = vadd.f32 %v84, %v379
  %v381 = vpop.f32.mrb[0].mxu0
  %382 = vmatprep.mubr.f32.mxu0 0.0
  %383 = vmatmul.mubr.f32.gmra.mrb[0].mxu0 %v109
  %v384 = vpop.f32.mrb[0].mxu0
  %v385 = vadd.f32 %v84, %v384
  %v386 = vpop.f32.mrb[0].mxu0
  %387 = vmatprep.mubr.f32.mxu0 0.0
  %388 = vmatmul.mubr.f32.gmra.mrb[0].mxu0 %v112
  %v389 = vpop.f32.mrb[0].mxu0
  %v390 = vadd.f32 %v84, %v389
  %v391 = vpop.f32.mrb[0].mxu0
  %392 = vmatprep.mubr.f32.mxu0 0.0
  %393 = vmatmul.mubr.f32.gmra.mrb[0].mxu0 %v115
  %v394 = vpop.f32.mrb[0].mxu0
  %v395 = vadd.f32 %v84, %v394
  %v396 = vpop.f32.mrb[0].mxu0
  %397 = vmatprep.mubr.f32.mxu0 0.0
  %398 = vmatmul.mubr.f32.gmra.mrb[0].mxu0 %v118
  %v399 = vpop.f32.mrb[0].mxu0
  %v400 = vadd.f32 %v84, %v399
  %v401 = vpop.f32.mrb[0].mxu0
  %402 = vmatprep.mubr.f32.mxu0 0.0
  %403 = vmatmul.mubr.f32.gmra.mrb[0].mxu0 %v121
  %v404 = vpop.f32.mrb[0].mxu0
  %v405 = vadd.f32 %v84, %v404
  %v406 = vpop.f32.mrb[0].mxu0
  %407 = vmatprep.mubr.f32.mxu0 0.0
  %408 = vmatmul.mubr.f32.gmra.mrb[0].mxu0 %v124
  %v409 = vpop.f32.mrb[0].mxu0
  %v410 = vadd.f32 %v84, %v409
  %v411 = vpop.f32.mrb[0].mxu0
  %412 = vmatprep.mubr.f32.mxu0 0.0
  %413 = vmatmul.mubr.f32.gmra.mrb[0].mxu0 %v127
  %v414 = vpop.f32.mrb[0].mxu0
  %v415 = vadd.f32 %v84, %v414
  %v416 = vpop.f32.mrb[0].mxu0
  %417 = vmatprep.mubr.f32.mxu0 0.0
  %418 = vmatmul.mubr.f32.gmra.mrb[0].mxu0 %v130
  %v419 = vpop.f32.mrb[0].mxu0
  %v420 = vadd.f32 %v84, %v419
  %v421 = vpop.f32.mrb[0].mxu0
  %422 = vmatprep.mubr.f32.mxu0 0.0
  %423 = vmatmul.mubr.f32.gmra.mrb[0].mxu0 %v133
  %v424 = vpop.f32.mrb[0].mxu0
  %v425 = vadd.f32 %v84, %v424
  %v426 = vpop.f32.mrb[0].mxu0
  %427 = vmatprep.mubr.f32.mxu0 0.0
  %428 = vmatmul.mubr.f32.gmra.mrb[0].mxu0 %v136
  %v429 = vpop.f32.mrb[0].mxu0
  %v430 = vadd.f32 %v84, %v429
  %v431 = vpop.f32.mrb[0].mxu0
  %432 = vmatprep.mubr.f32.mxu0 0.0
  %433 = vmatmul.mubr.f32.gmra.mrb[0].mxu0 %v139
  %v434 = vpop.f32.mrb[0].mxu0
  %v435 = vadd.f32 %v84, %v434
  %v436 = vpop.f32.mrb[0].mxu0
  %437 = vmatprep.mubr.f32.mxu0 0.0
  %438 = vmatmul.mubr.f32.gmra.mrb[0].mxu0 %v142
  %v439 = vpop.f32.mrb[0].mxu0
  %v440 = vadd.f32 %v84, %v439
  %v441 = vpop.f32.mrb[0].mxu0
  %442 = vmatprep.mubr.f32.mxu0 0.0
  %443 = vmatmul.mubr.f32.gmra.mrb[0].mxu0 %v145
  %v444 = vpop.f32.mrb[0].mxu0
  %v445 = vadd.f32 %v84, %v444
  %v446 = vpop.f32.mrb[0].mxu0
  %447 = vmatprep.mubr.f32.mxu0 0.0
  %448 = vmatmul.mubr.f32.gmra.mrb[0].mxu0 %v148
  %v449 = vpop.f32.mrb[0].mxu0
  %v450 = vadd.f32 %v84, %v449
  %v451 = vpop.f32.mrb[0].mxu0
  %452 = vmatprep.mubr.f32.mxu0 0.0
  %453 = vmatmul.mubr.f32.gmra.mrb[0].mxu0 %v151
  %v454 = vpop.f32.mrb[0].mxu0
  %v455 = vadd.f32 %v84, %v454
  %v456 = vpop.f32.mrb[0].mxu0
  %457 = vmatprep.mubr.f32.mxu0 0.0
  %458 = vmatmul.mubr.f32.gmra.mrb[0].mxu0 %v154
  %v459 = vpop.f32.mrb[0].mxu0
  %v460 = vadd.f32 %v84, %v459
  %v461 = vpop.f32.mrb[0].mxu0
  %462 = vmatprep.mubr.f32.mxu0 0.0
  %463 = vmatmul.mubr.f32.gmra.mrb[0].mxu0 %v157
  %v464 = vpop.f32.mrb[0].mxu0
  %v465 = vadd.f32 %v84, %v464
  %v466 = vpop.f32.mrb[0].mxu0
  %467 = vmatprep.mubr.f32.mxu0 0.0
  %468 = vmatmul.mubr.f32.gmra.mrb[0].mxu0 %v160
  %v469 = vpop.f32.mrb[0].mxu0
  %v470 = vadd.f32 %v84, %v469
  %v471 = vpop.f32.mrb[0].mxu0
  %472 = vmatprep.mubr.f32.mxu0 0.0
  %473 = vmatmul.mubr.f32.gmra.mrb[0].mxu0 %v163
  %v474 = vpop.f32.mrb[0].mxu0
  %v475 = vadd.f32 %v84, %v474
  %v476 = vpop.f32.mrb[0].mxu0
  %477 = vmatprep.mubr.f32.mxu0 0.0
  %478 = vmatmul.mubr.f32.gmra.mrb[0].mxu0 %v166
  %v479 = vpop.f32.mrb[0].mxu0
  %v480 = vadd.f32 %v84, %v479
  %v481 = vpop.f32.mrb[0].mxu0
  %482 = vmatprep.mubr.f32.mxu0 0.0
  %483 = vmatmul.mubr.f32.gmra.mrb[0].mxu0 %v169
  %v484 = vpop.f32.mrb[0].mxu0
  %v485 = vadd.f32 %v84, %v484
  %v486 = vpop.f32.mrb[0].mxu0
  %487 = vmatprep.mubr.f32.mxu0 0.0
  %488 = vmatmul.mubr.f32.gmra.mrb[0].mxu0 %v172
  %v489 = vpop.f32.mrb[0].mxu0
  %v490 = vadd.f32 %v84, %v489
  %v491 = vpop.f32.mrb[0].mxu0
  %492 = vmatprep.mubr.f32.mxu0 0.0
  %493 = vmatmul.mubr.f32.gmra.mrb[0].mxu0 %v175
  %v494 = vpop.f32.mrb[0].mxu0
  %v495 = vadd.f32 %v84, %v494
  %v496 = vpop.f32.mrb[0].mxu0
  %497 = vmatprep.mubr.f32.mxu0 0.0
  %498 = vmatmul.mubr.f32.gmra.mrb[0].mxu0 %v178
  %v499 = vpop.f32.mrb[0].mxu0
  %v500 = vadd.f32 %v84, %v499
  %v501 = vpop.f32.mrb[0].mxu0
  %502 = vmatprep.mubr.f32.mxu0 0.0
  %503 = vmatmul.mubr.f32.gmra.mrb[0].mxu0 %v181
  %v504 = vpop.f32.mrb[0].mxu0
  %v505 = vadd.f32 %v84, %v504
  %v506 = vpop.f32.mrb[0].mxu0
  %507 = vmatprep.mubr.f32.mxu0 0.0
  %508 = vmatmul.mubr.f32.gmra.mrb[0].mxu0 %v184
  %v509 = vpop.f32.mrb[0].mxu0
  %v510 = vadd.f32 %v84, %v509
  %v511 = vpop.f32.mrb[0].mxu0
  %512 = vmatprep.mubr.f32.mxu0 0.0
  %513 = vmatmul.mubr.f32.gmra.mrb[0].mxu0 %v187
  %v514 = vpop.f32.mrb[0].mxu0
  %v515 = vadd.f32 %v84, %v514
  %v516 = vpop.f32.mrb[0].mxu0
  %517 = vmatprep.mubr.f32.mxu0 0.0
  %518 = vmatmul.mubr.f32.gmra.mrb[0].mxu0 %v190
  %v519 = vpop.f32.mrb[0].mxu0
  %v520 = vadd.f32 %v84, %v519
  %v521 = vpop.f32.mrb[0].mxu0
  %522 = vmatprep.mubr.f32.mxu0 0.0
  %523 = vmatmul.mubr.f32.gmra.mrb[0].mxu0 %v193
  %v524 = vpop.f32.mrb[0].mxu0
  %v525 = vadd.f32 %v84, %v524
  %v526 = vpop.f32.mrb[0].mxu0
  %527 = vmatprep.mubr.f32.mxu0 0.0
  %528 = vmatmul.mubr.f32.gmra.mrb[0].mxu0 %v196
  %v529 = vpop.f32.mrb[0].mxu0
  %v530 = vadd.f32 %v84, %v529
  %v531 = vpop.f32.mrb[0].mxu0
  %532 = vmatprep.mubr.f32.mxu0 0.0
  %533 = vmatmul.mubr.f32.gmra.mrb[0].mxu0 %v199
  %v534 = vpop.f32.mrb[0].mxu0
  %v535 = vadd.f32 %v84, %v534
  %v536 = vpop.f32.mrb[0].mxu0
  %537 = vmatprep.mubr.f32.mxu0 0.0
  %538 = vmatmul.mubr.f32.gmra.mrb[0].mxu0 %v202
  %v539 = vpop.f32.mrb[0].mxu0
  %v540 = vadd.f32 %v84, %v539
  %v541 = vpop.f32.mrb[0].mxu0
  %542 = vmatprep.mubr.f32.mxu0 0.0
  %543 = vmatmul.mubr.f32.gmra.mrb[0].mxu0 %v205
  %v544 = vpop.f32.mrb[0].mxu0
  %v545 = vadd.f32 %v84, %v544
  %v546 = vpop.f32.mrb[0].mxu0
  %547 = vmatprep.mubr.f32.mxu0 0.0
  %548 = vmatmul.mubr.f32.gmra.mrb[0].mxu0 %v208
  %v549 = vpop.f32.mrb[0].mxu0
  %v550 = vadd.f32 %v84, %v549
  %v551 = vpop.f32.mrb[0].mxu0
  %552 = vmatprep.mubr.f32.mxu0 0.0
  %553 = vmatmul.mubr.f32.gmra.mrb[0].mxu0 %v211
  %v554 = vpop.f32.mrb[0].mxu0
  %v555 = vadd.f32 %v84, %v554
  %v556 = vpop.f32.mrb[0].mxu0
  %557 = vmatprep.mubr.f32.mxu0 0.0
  %558 = vmatmul.mubr.f32.gmra.mrb[0].mxu0 %v214
  %v559 = vpop.f32.mrb[0].mxu0
  %v560 = vadd.f32 %v84, %v559
  %v561 = vpop.f32.mrb[0].mxu0
  %562 = vmatprep.mubr.f32.mxu0 0.0
  %563 = vmatmul.mubr.f32.gmra.mrb[0].mxu0 %v217
  %v564 = vpop.f32.mrb[0].mxu0
  %v565 = vadd.f32 %v84, %v564
  %v566 = vpop.f32.mrb[0].mxu0
  %567 = vmatprep.mubr.f32.mxu0 0.0
  %568 = vmatmul.mubr.f32.gmra.mrb[0].mxu0 %v220
  %v569 = vpop.f32.mrb[0].mxu0
  %v570 = vadd.f32 %v84, %v569
  %v571 = vpop.f32.mrb[0].mxu0
  %572 = vmatprep.mubr.f32.mxu0 0.0
  %573 = vmatmul.mubr.f32.gmra.mrb[0].mxu0 %v223
  %v574 = vpop.f32.mrb[0].mxu0
  %v575 = vadd.f32 %v84, %v574
  %v576 = vpop.f32.mrb[0].mxu0
  %577 = vmatprep.mubr.f32.mxu0 0.0
  %578 = vmatmul.mubr.f32.gmra.mrb[0].mxu0 %v226
  %v579 = vpop.f32.mrb[0].mxu0
  %v580 = vadd.f32 %v84, %v579
  %v581 = vpop.f32.mrb[0].mxu0
  %582 = vmatprep.mubr.f32.mxu0 0.0
  %583 = vmatmul.mubr.f32.gmra.mrb[0].mxu0 %v229
  %v584 = vpop.f32.mrb[0].mxu0
  %v585 = vadd.f32 %v84, %v584
  %v586 = vpop.f32.mrb[0].mxu0
  %587 = vmatprep.mubr.f32.mxu0 0.0
  %588 = vmatmul.mubr.f32.gmra.mrb[0].mxu0 %v232
  %v589 = vpop.f32.mrb[0].mxu0
  %v590 = vadd.f32 %v84, %v589
  %v591 = vpop.f32.mrb[0].mxu0
  %592 = vmatprep.mubr.f32.mxu0 0.0
  %593 = vmatmul.mubr.f32.gmra.mrb[0].mxu0 %v235
  %v594 = vpop.f32.mrb[0].mxu0
  %v595 = vadd.f32 %v84, %v594
  %v596 = vpop.f32.mrb[0].mxu0
  %597 = vmatprep.mubr.f32.mxu0 0.0
  %598 = vmatmul.mubr.f32.gmra.mrb[0].mxu0 %v238
  %v599 = vpop.f32.mrb[0].mxu0
  %v600 = vadd.f32 %v84, %v599
  %v601 = vpop.f32.mrb[0].mxu0
  %602 = vmatprep.mubr.f32.mxu0 0.0
  %603 = vmatmul.mubr.f32.gmra.mrb[0].mxu0 %v241
  %v604 = vpop.f32.mrb[0].mxu0
  %v605 = vadd.f32 %v84, %v604
  %v606 = vpop.f32.mrb[0].mxu0
  %607 = vmatprep.mubr.f32.mxu0 0.0
  %608 = vmatmul.mubr.f32.gmra.mrb[0].mxu0 %v244
  %v609 = vpop.f32.mrb[0].mxu0
  %v610 = vadd.f32 %v84, %v609
  %v611 = vpop.f32.mrb[0].mxu0
  %612 = vmatprep.mubr.f32.mxu0 0.0
  %613 = vmatmul.mubr.f32.gmra.mrb[0].mxu0 %v247
  %v614 = vpop.f32.mrb[0].mxu0
  %v615 = vadd.f32 %v84, %v614
  %v616 = vpop.f32.mrb[0].mxu0
  %617 = vmatprep.mubr.f32.mxu0 0.0
  %618 = vmatmul.mubr.f32.gmra.mrb[0].mxu0 %v250
  %v619 = vpop.f32.mrb[0].mxu0
  %v620 = vadd.f32 %v84, %v619
  %v621 = vpop.f32.mrb[0].mxu0
  %622 = vmatprep.mubr.f32.mxu0 0.0
  %623 = vmatmul.mubr.f32.gmra.mrb[0].mxu0 %v253
  %v624 = vpop.f32.mrb[0].mxu0
  %v625 = vadd.f32 %v84, %v624
  %v626 = vpop.f32.mrb[0].mxu0
  %627 = vmatprep.mubr.f32.mxu0 0.0
  %628 = vmatmul.mubr.f32.gmra.mrb[0].mxu0 %v256
  %v629 = vpop.f32.mrb[0].mxu0
  %v630 = vadd.f32 %v84, %v629
  %v631 = vpop.f32.mrb[0].mxu0
  %632 = vmatprep.mubr.f32.mxu0 0.0
  %633 = vmatmul.mubr.f32.gmra.mrb[0].mxu0 %v259
  %v634 = vpop.f32.mrb[0].mxu0
  %v635 = vadd.f32 %v84, %v634
  %v636 = vpop.f32.mrb[0].mxu0
  %637 = vmatprep.mubr.f32.mxu0 0.0
  %638 = vmatmul.mubr.f32.gmra.mrb[0].mxu0 %v262
  %v639 = vpop.f32.mrb[0].mxu0
  %v640 = vadd.f32 %v84, %v639
  %v641 = vpop.f32.mrb[0].mxu0
  %642 = vmatprep.mubr.f32.mxu0 0.0
  %643 = vmatmul.mubr.f32.gmra.mrb[0].mxu0 %v265
  %v644 = vpop.f32.mrb[0].mxu0
  %v645 = vadd.f32 %v84, %v644
  %v646 = vpop.f32.mrb[0].mxu0
  %647 = vmatprep.mubr.f32.mxu0 0.0
  %648 = vmatmul.mubr.f32.gmra.mrb[0].mxu0 %v268
  %v649 = vpop.f32.mrb[0].mxu0
  %v650 = vadd.f32 %v84, %v649
  %v651 = vpop.f32.mrb[0].mxu0
  %652 = vmatprep.mubr.f32.mxu0 0.0
  %653 = vmatmul.mubr.f32.gmra.mrb[0].mxu0 %v271
  %v654 = vpop.f32.mrb[0].mxu0
  %v655 = vadd.f32 %v84, %v654
  %v656 = vpop.f32.mrb[0].mxu0
  %657 = vmatprep.mubr.f32.mxu0 0.0
  %658 = vmatmul.mubr.f32.gmra.mrb[0].mxu0 %v274
  %v659 = vpop.f32.mrb[0].mxu0
  %v660 = vadd.f32 %v84, %v659
  %v661 = vpop.f32.mrb[0].mxu0
  %662 = vmatprep.mubr.f32.mxu0 0.0
  %663 = vmatmul.mubr.f32.gmra.mrb[0].mxu0 %v277
  %v664 = vpop.f32.mrb[0].mxu0
  %v665 = vadd.f32 %v84, %v664
  %v666 = vpop.f32.mrb[0].mxu0
  %667 = vdwg.mxu0
  %vm668 = vcmask 146432
  %669 = vst.msk [vmem:[%s3] sm:$0xff] %vm668, %v350
  %670 = vst.msk [vmem:[%s3 + $0x8] sm:$0xff] %vm668, %v355
  %671 = vst.msk [vmem:[%s3 + $0x10] sm:$0xff] %vm668, %v360
  %672 = vst.msk [vmem:[%s3 + $0x18] sm:$0xff] %vm668, %v365
  %673 = vst.msk [vmem:[%s3 + $0x20] sm:$0xff] %vm668, %v370
  %674 = vst.msk [vmem:[%s3 + $0x28] sm:$0xff] %vm668, %v375
  %675 = vst.msk [vmem:[%s3 + $0x30] sm:$0xff] %vm668, %v380
  %676 = vst.msk [vmem:[%s3 + $0x38] sm:$0xff] %vm668, %v385
  %677 = vst.msk [vmem:[%s3 + $0x40] sm:$0xff] %vm668, %v390
  %678 = vst.msk [vmem:[%s3 + $0x48] sm:$0xff] %vm668, %v395
  %679 = vst.msk [vmem:[%s3 + $0x50] sm:$0xff] %vm668, %v400
  %680 = vst.msk [vmem:[%s3 + $0x58] sm:$0xff] %vm668, %v405
  %681 = vst.msk [vmem:[%s3 + $0x60] sm:$0xff] %vm668, %v410
  %682 = vst.msk [vmem:[%s3 + $0x68] sm:$0xff] %vm668, %v415
  %683 = vst.msk [vmem:[%s3 + $0x70] sm:$0xff] %vm668, %v420
  %684 = vst.msk [vmem:[%s3 + $0x78] sm:$0xff] %vm668, %v425
  %685 = vst.msk [vmem:[%s3 + $0x80] sm:$0xff] %vm668, %v430
  %686 = vst.msk [vmem:[%s3 + $0x88] sm:$0xff] %vm668, %v435
  %687 = vst.msk [vmem:[%s3 + $0x90] sm:$0xff] %vm668, %v440
  %688 = vst.msk [vmem:[%s3 + $0x98] sm:$0xff] %vm668, %v445
  %689 = vst.msk [vmem:[%s3 + $0xa0] sm:$0xff] %vm668, %v450
  %690 = vst.msk [vmem:[%s3 + $0xa8] sm:$0xff] %vm668, %v455
  %691 = vst.msk [vmem:[%s3 + $0xb0] sm:$0xff] %vm668, %v460
  %692 = vst.msk [vmem:[%s3 + $0xb8] sm:$0xff] %vm668, %v465
  %693 = vst.msk [vmem:[%s3 + $0xc0] sm:$0xff] %vm668, %v470
  %694 = vst.msk [vmem:[%s3 + $0xc8] sm:$0xff] %vm668, %v475
  %695 = vst.msk [vmem:[%s3 + $0xd0] sm:$0xff] %vm668, %v480
  %696 = vst.msk [vmem:[%s3 + $0xd8] sm:$0xff] %vm668, %v485
  %697 = vst.msk [vmem:[%s3 + $0xe0] sm:$0xff] %vm668, %v490
  %698 = vst.msk [vmem:[%s3 + $0xe8] sm:$0xff] %vm668, %v495
  %699 = vst.msk [vmem:[%s3 + $0xf0] sm:$0xff] %vm668, %v500
  %700 = vst.msk [vmem:[%s3 + $0xf8] sm:$0xff] %vm668, %v505
  %701 = vst.msk [vmem:[%s3 + $0x100] sm:$0xff] %vm668, %v510
  %702 = vst.msk [vmem:[%s3 + $0x108] sm:$0xff] %vm668, %v515
  %703 = vst.msk [vmem:[%s3 + $0x110] sm:$0xff] %vm668, %v520
  %704 = vst.msk [vmem:[%s3 + $0x118] sm:$0xff] %vm668, %v525
  %705 = vst.msk [vmem:[%s3 + $0x120] sm:$0xff] %vm668, %v530
  %706 = vst.msk [vmem:[%s3 + $0x128] sm:$0xff] %vm668, %v535
  %707 = vst.msk [vmem:[%s3 + $0x130] sm:$0xff] %vm668, %v540
  %708 = vst.msk [vmem:[%s3 + $0x138] sm:$0xff] %vm668, %v545
  %709 = vst.msk [vmem:[%s3 + $0x140] sm:$0xff] %vm668, %v550
  %710 = vst.msk [vmem:[%s3 + $0x148] sm:$0xff] %vm668, %v555
  %711 = vst.msk [vmem:[%s3 + $0x150] sm:$0xff] %vm668, %v560
  %712 = vst.msk [vmem:[%s3 + $0x158] sm:$0xff] %vm668, %v565
  %713 = vst.msk [vmem:[%s3 + $0x160] sm:$0xff] %vm668, %v570
  %714 = vst.msk [vmem:[%s3 + $0x168] sm:$0xff] %vm668, %v575
  %715 = vst.msk [vmem:[%s3 + $0x170] sm:$0xff] %vm668, %v580
  %716 = vst.msk [vmem:[%s3 + $0x178] sm:$0xff] %vm668, %v585
  %717 = vst.msk [vmem:[%s3 + $0x180] sm:$0xff] %vm668, %v590
  %718 = vst.msk [vmem:[%s3 + $0x188] sm:$0xff] %vm668, %v595
  %719 = vst.msk [vmem:[%s3 + $0x190] sm:$0xff] %vm668, %v600
  %720 = vst.msk [vmem:[%s3 + $0x198] sm:$0xff] %vm668, %v605
  %721 = vst.msk [vmem:[%s3 + $0x1a0] sm:$0xff] %vm668, %v610
  %722 = vst.msk [vmem:[%s3 + $0x1a8] sm:$0xff] %vm668, %v615
  %723 = vst.msk [vmem:[%s3 + $0x1b0] sm:$0xff] %vm668, %v620
  %724 = vst.msk [vmem:[%s3 + $0x1b8] sm:$0xff] %vm668, %v625
  %725 = vst.msk [vmem:[%s3 + $0x1c0] sm:$0xff] %vm668, %v630
  %726 = vst.msk [vmem:[%s3 + $0x1c8] sm:$0xff] %vm668, %v635
  %727 = vst.msk [vmem:[%s3 + $0x1d0] sm:$0xff] %vm668, %v640
  %728 = vst.msk [vmem:[%s3 + $0x1d8] sm:$0xff] %vm668, %v645
  %729 = vst.msk [vmem:[%s3 + $0x1e0] sm:$0xff] %vm668, %v650
  %730 = vst.msk [vmem:[%s3 + $0x1e8] sm:$0xff] %vm668, %v655
  %731 = vst.msk [vmem:[%s3 + $0x1f0] sm:$0xff] %vm668, %v660
  %732 = vst.msk [vmem:[%s3 + $0x1f8] sm:$0xff] %vm668, %v665
  // Predicated region
  $region14: #{tpu_custom_call.1} parent=0 // pred_check
    _
  $region15: #{tpu_custom_call.1} parent=0 // pred_check_branch
    %734 = sbr.rel (0) target = $region17
  $region16: #{tpu_custom_call.1} parent=0 // pred_region
    _
  $region17: #{tpu_custom_call.1} parent=0 // pred_fallthru
    _
  // Predicated region
  $region18: #{tpu_custom_call.1} parent=0 // pred_check
    _
  $region19: #{tpu_custom_call.1} parent=0 // pred_check_branch
    %736 = sbr.rel (0) target = $region21
  $region20: #{tpu_custom_call.1} parent=0 // pred_region
    _
  $region21: #{tpu_custom_call.1} parent=0 // pred_fallthru
    _

</llo_original>
